<compile_context>
chip_gen: v6e
topology: v6e:2x2x1
jax: 0.10.0
libtpu: 0.0.40
codegen_flags: <defaults>
</compile_context>

<pallas_src>
import functools

import jax
import jax.numpy as jnp
import numpy as np
from jax.experimental import pallas as pl
from jax.experimental.pallas import tpu as pltpu

IN_EPS = 1e-3   # InstanceNorm2d(eps=0.001)
BN_EPS = 1e-5   # BatchNorm2d default eps


def _diff_unpool_kernel(xu_ref, xd_ref, w_ref, b_ref, ss_ref, out_ref):
    """One grid step processes Bt batch elements (Bt small, budget-derived).

    xu_ref : [Bt, Cin, N]   x_up tile (N = full array extent, no padding)
    xd_ref : [Bt, C,   M]   x_down tile
    w_ref  : [M, Cin]       1x1 conv weight
    b_ref  : [M, 1]         1x1 conv bias
    ss_ref : [Cin, 2]       packed [BN scale | BN shift] (eval-mode BN folded)
    out_ref: [Bt, C,   N]
    """
    bt, cin, n = xu_ref.shape
    m = w_ref.shape[0]
    inv_n = 1.0 / float(n)

    x = xu_ref[...].astype(jnp.float32)                       # [Bt, Cin, N]

    # ---- InstanceNorm2d (no affine), biased variance, one pass -------------
    mean = jnp.sum(x, axis=2, keepdims=True) * inv_n           # [Bt, Cin, 1]
    ex2 = jnp.sum(x * x, axis=2, keepdims=True) * inv_n
    var = ex2 - mean * mean

    # ---- eval-mode BatchNorm folded into the InstanceNorm rsqrt + ReLU -----
    scale = ss_ref[:, 0:1][None]                               # [1, Cin, 1]
    shift = ss_ref[:, 1:2][None]                               # [1, Cin, 1]
    g = jax.lax.rsqrt(var + IN_EPS) * scale                    # [Bt, Cin, 1]
    h = jnp.maximum((x - mean) * g + shift, 0.0)               # [Bt, Cin, N]

    # ---- 1x1 conv: batched MXU matmul  embed[b,m,n] = sum_c w[m,c] h[b,c,n] -
    wb = jnp.broadcast_to(w_ref[...][None], (bt, m, cin))      # tiny, once/step
    embed = jax.lax.dot_general(
        wb, h,
        dimension_numbers=(((2,), (1,)), ((0,), (0,))),
        preferred_element_type=jnp.float32)                    # [Bt, M, N]
    embed = embed + b_ref[...][None]                           # [1, M, 1] bcast

    # ---- softmax over the output_points (M) axis ----------------------------
    m_max = jnp.max(embed, axis=1, keepdims=True)              # [Bt, 1, N]
    p = jnp.exp(embed - m_max)
    denom = jnp.sum(p, axis=1, keepdims=True)
    s = p * pl.reciprocal(denom, approx=True)                  # [Bt, M, N]

    # ---- out[b] = x_down[b] @ S[b]   ('bcm,bmn->bcn'), batched MXU matmul ---
    out = jax.lax.dot_general(
        xd_ref[...].astype(jnp.float32), s,
        dimension_numbers=(((2,), (1,)), ((0,), (0,))),
        preferred_element_type=jnp.float32)                    # [Bt, C, N]
    out_ref[...] = out.astype(out_ref.dtype)


def _round_up(x, k):
    return ((x + k - 1) // k) * k


def _vmem_per_batch_elem(cin, c, m, n, in_bytes):
    """Conservative VMEM bytes per batch element in one grid step."""
    n_l = _round_up(n, 128)     # lane-padded N
    m_l = _round_up(m, 128)     # x_down's last dim is lane-padded (feedback #10)
    cin_s = _round_up(cin, 8)
    c_s = _round_up(c, 8)
    m_s = _round_up(m, 8)
    # Double-buffered pipelined blocks (xu, xd, out).
    blocks = 2 * (cin_s * n_l * in_bytes + c_s * m_l * in_bytes + c_s * n_l * 4)
    # In-kernel f32 temporaries (x, h, embed/p/s, out), conservative high-water.
    temps = (2 * cin_s + 3 * m_s + c_s) * n_l * 4
    return blocks + temps


def _choose_bt(b, per_elem_bytes, budget_bytes, bt_cap=8):
    """Largest divisor of B that fits the VMEM budget, keeps Bt <= 8, and
    keeps >= 4 grid steps when B >= 4 (>= 2 steps per v7x TensorCore)."""
    if b <= 1:
        return 1
    cap = min(bt_cap,
              max(1, b // 4),
              max(1, budget_bytes // max(per_elem_bytes, 1)),
              b)
    for bt in range(int(cap), 0, -1):
        if b % bt == 0:
            return bt
    return 1


@jax.jit
def diff_unpool_forward(x_up, x_down, params):
    """x_up: [B, Cin, N, 1], x_down: [B, C, M, 1] (NCHW, W==1). Returns [B, C, N, 1]."""
    w, b = params["w"], params["b"]
    gamma, beta = params["gamma"], params["beta"]
    rmean, rvar = params["rmean"], params["rvar"]

    B, Cin, N, _ = x_up.shape
    _, C, M, _ = x_down.shape

    # Fold eval-mode BatchNorm into per-channel scale/shift, packed in one block.
    scale = gamma.astype(jnp.float32) * jax.lax.rsqrt(rvar.astype(jnp.float32) + BN_EPS)
    shift = beta.astype(jnp.float32) - scale * rmean.astype(jnp.float32)
    ss = jnp.stack([scale, shift], axis=1)                         # [Cin, 2]

    w2 = w.reshape(M, Cin).astype(jnp.float32)                     # [M, Cin]
    b2 = b.reshape(M, 1).astype(jnp.float32)                       # [M, 1]

    # Drop trailing W=1 with a free reshape (no HBM slice/cast pass).
    xu = x_up.reshape(B, Cin, N)
    xd = x_down.reshape(B, C, M)

    # ---- VMEM-budgeted batch tiling; Bt | B so no pad / no output slice -----
    in_bytes = max(xu.dtype.itemsize, xd.dtype.itemsize)
    per_elem = _vmem_per_batch_elem(Cin, C, M, N, in_bytes)
    budget = 24 << 20                         # fits v6e/v7x scoped defaults
    Bt = _choose_bt(B, per_elem, budget)
    n_steps = B // Bt

    fixed = 4 * (2 * _round_up(M, 8) * _round_up(Cin, 128)         # w (x2 bufs)
                 + 2 * _round_up(M, 8) * 128                       # bias
                 + 2 * _round_up(Cin, 8) * 128                     # ss
                 + Bt * _round_up(M, 8) * _round_up(Cin, 128))     # broadcast w
    vmem_limit = int(min(56 << 20,
                         max(32 << 20, int((fixed + Bt * per_elem) * 1.25))))

    out_dtype = x_down.dtype
    cost = pl.CostEstimate(
        flops=2 * B * N * M * (Cin + C) + 8 * B * Cin * N,
        transcendentals=B * M * N + B * Cin,
        bytes_accessed=int(xu.size * xu.dtype.itemsize
                           + xd.size * xd.dtype.itemsize
                           + B * C * N * np.dtype(out_dtype).itemsize
                           + (w2.size + b2.size + ss.size) * 4),
    )

    out = pl.pallas_call(
        _diff_unpool_kernel,
        out_shape=jax.ShapeDtypeStruct((B, C, N), out_dtype),
        grid_spec=pltpu.PrefetchScalarGridSpec(
            num_scalar_prefetch=0,
            grid=(n_steps,),
            in_specs=[
                pl.BlockSpec((Bt, Cin, N), lambda i: (i, 0, 0)),   # x_up
                pl.BlockSpec((Bt, C, M),   lambda i: (i, 0, 0)),   # x_down
                pl.BlockSpec((M, Cin),     lambda i: (0, 0)),      # conv weight
                pl.BlockSpec((M, 1),       lambda i: (0, 0)),      # conv bias
                pl.BlockSpec((Cin, 2),     lambda i: (0, 0)),      # BN scale|shift
            ],
            out_specs=pl.BlockSpec((Bt, C, N), lambda i: (i, 0, 0)),
        ),
        compiler_params=pltpu.CompilerParams(
            dimension_semantics=("parallel",),
            vmem_limit_bytes=vmem_limit,
        ),
        cost_estimate=cost,
    )(xu, xd, w2, b2, ss)

    return out[..., None]                                          # [B, C, N, 1]


def reference_forward(x_up, x_down, params):
    """Pure-JAX reference mirroring the PyTorch forward (eval-mode BN)."""
    w, b = params["w"], params["b"]
    gamma, beta = params["gamma"], params["beta"]
    rmean, rvar = params["rmean"], params["rvar"]
    x = x_up[..., 0]                               # [B, Cin, N]
    mean = jnp.mean(x, axis=2, keepdims=True)
    var = jnp.mean((x - mean) ** 2, axis=2, keepdims=True)
    h = (x - mean) / jnp.sqrt(var + IN_EPS)
    h = (h - rmean[None, :, None]) / jnp.sqrt(rvar[None, :, None] + BN_EPS)
    h = h * gamma[None, :, None] + beta[None, :, None]
    h = jnp.maximum(h, 0.0)
    embed = jnp.einsum("mc,bcn->bmn", w.reshape(w.shape[0], -1), h) + b[None, :, None]
    S = jax.nn.softmax(embed, axis=1)              # [B, M, N]
    out = jnp.einsum("bcm,bmn->bcn", x_down[..., 0], S)
    return out[..., None]


if __name__ == "__main__":
    # Small shapes consistent with OANet's diff_unpool:
    #   x_up  : [B, in_channel, N, 1]
    #   x_down: [B, in_channel, output_points, 1]
    B, Cin, N, M = 4, 32, 128, 16                  # in_channel=32, output_points=16
    C = Cin                                        # x_down channel count

    key = jax.random.PRNGKey(0)
    k = jax.random.split(key, 8)
    x_up = jax.random.normal(k[0], (B, Cin, N, 1), dtype=jnp.float32)
    x_down = jax.random.normal(k[1], (B, C, M, 1), dtype=jnp.float32)

    # Deterministic synthetic parameters (Conv2d(Cin, M, 1) + BatchNorm2d(Cin), eval mode).
    params = {
        "w": jax.random.normal(k[2], (M, Cin), dtype=jnp.float32) * 0.1,   # conv weight [M,Cin,1,1] -> [M,Cin]
        "b": jax.random.normal(k[3], (M,), dtype=jnp.float32) * 0.1,       # conv bias
        "gamma": 1.0 + 0.1 * jax.random.normal(k[4], (Cin,), dtype=jnp.float32),
        "beta": 0.1 * jax.random.normal(k[5], (Cin,), dtype=jnp.float32),
        "rmean": 0.1 * jax.random.normal(k[6], (Cin,), dtype=jnp.float32),
        "rvar": jax.random.uniform(k[7], (Cin,), minval=0.5, maxval=1.5, dtype=jnp.float32),
    }

    out = diff_unpool_forward(x_up, x_down, params)
    jax.block_until_ready(out)

    ref = reference_forward(x_up, x_down, params)
    # Tolerance 2e-3 accounts for the approx EUP reciprocal (~2^-12 rel err)
    # and the one-pass variance (E[x^2]-mean^2).
    np.testing.assert_allclose(np.asarray(out), np.asarray(ref), rtol=2e-3, atol=2e-3)
    assert out.shape == (B, C, N, 1)

    print("KERNEL_OK")
</pallas_src>

<mosaic_0001>
module attributes {stable_mosaic.version = 11 : i64} {
  func.func @_diff_unpool_kernel(%arg0: i32, %arg1: memref<1x32x128xf32, #tpu.memory_space<vmem>>, %arg2: memref<1x32x16xf32, #tpu.memory_space<vmem>>, %arg3: memref<16x32xf32, #tpu.memory_space<vmem>>, %arg4: memref<16x1xf32, #tpu.memory_space<vmem>>, %arg5: memref<32x2xf32, #tpu.memory_space<vmem>>, %arg6: memref<1x32x128xf32, #tpu.memory_space<vmem>>) attributes {dimension_semantics = [#tpu.dimension_semantics<parallel>], iteration_bounds = array<i64: 4>, scalar_prefetch = 0 : i64, scratch_operands = 0 : i64, tpu.core_type = #tpu.core_type<tc>, window_params = [{transform_indices = @transform_0, window_bounds = array<i64: 1, 32, 128>}, {transform_indices = @transform_1, window_bounds = array<i64: 1, 32, 16>}, {pipeline_mode = #tpu.pipeline_mode<synchronous>, transform_indices = @transform_2, window_bounds = array<i64: 16, 32>}, {pipeline_mode = #tpu.pipeline_mode<synchronous>, transform_indices = @transform_3, window_bounds = array<i64: 16, 1>}, {pipeline_mode = #tpu.pipeline_mode<synchronous>, transform_indices = @transform_4, window_bounds = array<i64: 32, 2>}, {transform_indices = @transform_5, window_bounds = array<i64: 1, 32, 128>}]} {
    %c0 = arith.constant 0 : index
    %c0_0 = arith.constant 0 : index
    %c0_1 = arith.constant 0 : index
    %0 = vector.load %arg1[%c0, %c0_0, %c0_1] : memref<1x32x128xf32, #tpu.memory_space<vmem>>, vector<1x32x128xf32>
    %cst = arith.constant dense<0.000000e+00> : vector<1x32xf32>
    %1 = vector.multi_reduction <add>, %0, %cst [2] : vector<1x32x128xf32> to vector<1x32xf32>
    %2 = vector.shape_cast %1 : vector<1x32xf32> to vector<1x32x1xf32>
    %cst_2 = arith.constant 7.812500e-03 : f32
    %3 = vector.broadcast %cst_2 : f32 to vector<1x32x1xf32>
    %4 = arith.mulf %2, %3 : vector<1x32x1xf32>
    %5 = arith.mulf %0, %0 : vector<1x32x128xf32>
    %cst_3 = arith.constant dense<0.000000e+00> : vector<1x32xf32>
    %6 = vector.multi_reduction <add>, %5, %cst_3 [2] : vector<1x32x128xf32> to vector<1x32xf32>
    %7 = vector.shape_cast %6 : vector<1x32xf32> to vector<1x32x1xf32>
    %cst_4 = arith.constant 7.812500e-03 : f32
    %8 = vector.broadcast %cst_4 : f32 to vector<1x32x1xf32>
    %9 = arith.mulf %7, %8 : vector<1x32x1xf32>
    %10 = arith.mulf %4, %4 : vector<1x32x1xf32>
    %11 = arith.subf %9, %10 : vector<1x32x1xf32>
    %c0_5 = arith.constant 0 : index
    %c0_6 = arith.constant 0 : index
    %12 = vector.load %arg5[%c0_5, %c0_6] : memref<32x2xf32, #tpu.memory_space<vmem>>, vector<32x1xf32>
    %13 = vector.shape_cast %12 : vector<32x1xf32> to vector<1x32x1xf32>
    %c0_7 = arith.constant 0 : index
    %c1 = arith.constant 1 : index
    %14 = vector.load %arg5[%c0_7, %c1] : memref<32x2xf32, #tpu.memory_space<vmem>>, vector<32x1xf32>
    %15 = vector.shape_cast %14 : vector<32x1xf32> to vector<1x32x1xf32>
    %cst_8 = arith.constant 1.000000e-03 : f32
    %16 = vector.broadcast %cst_8 : f32 to vector<1x32x1xf32>
    %17 = arith.addf %11, %16 : vector<1x32x1xf32>
    %18 = math.rsqrt %17 : vector<1x32x1xf32>
    %19 = arith.mulf %18, %13 : vector<1x32x1xf32>
    %20 = vector.broadcast %4 : vector<1x32x1xf32> to vector<1x32x128xf32>
    %21 = arith.subf %0, %20 : vector<1x32x128xf32>
    %22 = vector.broadcast %19 : vector<1x32x1xf32> to vector<1x32x128xf32>
    %23 = arith.mulf %21, %22 : vector<1x32x128xf32>
    %24 = vector.broadcast %15 : vector<1x32x1xf32> to vector<1x32x128xf32>
    %25 = arith.addf %23, %24 : vector<1x32x128xf32>
    %cst_9 = arith.constant 0.000000e+00 : f32
    %26 = vector.broadcast %cst_9 : f32 to vector<1x32x128xf32>
    %27 = arith.maximumf %25, %26 : vector<1x32x128xf32>
    %c0_10 = arith.constant 0 : index
    %c0_11 = arith.constant 0 : index
    %28 = vector.load %arg3[%c0_10, %c0_11] : memref<16x32xf32, #tpu.memory_space<vmem>>, vector<16x32xf32>
    %29 = vector.shape_cast %28 : vector<16x32xf32> to vector<1x16x32xf32>
    %cst_12 = arith.constant dense<0.000000e+00> : vector<1x16x128xf32>
    %30 = tpu.matmul %29, %27, %cst_12 {dimension_numbers = #tpu.dot_dimension_numbers<[2], [1], [1], [2], [0, 0, 0, 1, 1, 2], [0], [0]>} : vector<1x16x32xf32>, vector<1x32x128xf32>, vector<1x16x128xf32> -> vector<1x16x128xf32>
    %c0_13 = arith.constant 0 : index
    %c0_14 = arith.constant 0 : index
    %31 = vector.load %arg4[%c0_13, %c0_14] : memref<16x1xf32, #tpu.memory_space<vmem>>, vector<16x1xf32>
    %32 = vector.shape_cast %31 : vector<16x1xf32> to vector<1x16x1xf32>
    %33 = vector.broadcast %32 : vector<1x16x1xf32> to vector<1x16x128xf32>
    %34 = arith.addf %30, %33 : vector<1x16x128xf32>
    %cst_15 = arith.constant dense<0xFF800000> : vector<1x128xf32>
    %35 = vector.multi_reduction <maximumf>, %34, %cst_15 [1] : vector<1x16x128xf32> to vector<1x128xf32>
    %36 = vector.shape_cast %35 : vector<1x128xf32> to vector<1x1x128xf32>
    %37 = vector.broadcast %36 : vector<1x1x128xf32> to vector<1x16x128xf32>
    %38 = arith.subf %34, %37 : vector<1x16x128xf32>
    %39 = math.exp %38 : vector<1x16x128xf32>
    %cst_16 = arith.constant dense<0.000000e+00> : vector<1x128xf32>
    %40 = vector.multi_reduction <add>, %39, %cst_16 [1] : vector<1x16x128xf32> to vector<1x128xf32>
    %41 = vector.shape_cast %40 : vector<1x128xf32> to vector<1x1x128xf32>
    %42 = tpu.reciprocal %41 {approx = true} : vector<1x1x128xf32> -> vector<1x1x128xf32>
    %43 = vector.broadcast %42 : vector<1x1x128xf32> to vector<1x16x128xf32>
    %44 = arith.mulf %39, %43 : vector<1x16x128xf32>
    %c0_17 = arith.constant 0 : index
    %c0_18 = arith.constant 0 : index
    %c0_19 = arith.constant 0 : index
    %45 = vector.load %arg2[%c0_17, %c0_18, %c0_19] : memref<1x32x16xf32, #tpu.memory_space<vmem>>, vector<1x32x16xf32>
    %cst_20 = arith.constant dense<0.000000e+00> : vector<1x32x128xf32>
    %46 = tpu.matmul %45, %44, %cst_20 {dimension_numbers = #tpu.dot_dimension_numbers<[2], [1], [1], [2], [0, 0, 0, 1, 1, 2], [0], [0]>} : vector<1x32x16xf32>, vector<1x16x128xf32>, vector<1x32x128xf32> -> vector<1x32x128xf32>
    %c0_21 = arith.constant 0 : index
    %c0_22 = arith.constant 0 : index
    %c0_23 = arith.constant 0 : index
    %47 = vector.load %arg6[%c0_21, %c0_22, %c0_23] : memref<1x32x128xf32, #tpu.memory_space<vmem>>, vector<1x32x128xf32>
    tpu.vector_store %arg6[%c0_21, %c0_22, %c0_23], %46 {strides = array<i32>} : memref<1x32x128xf32, #tpu.memory_space<vmem>>, vector<1x32x128xf32>,
    return
  }
  func.func @transform_0(%arg0: i32) -> (i32, i32, i32) {
    %c0_i32 = arith.constant 0 : i32
    %c0_i32_0 = arith.constant 0 : i32
    %c0_i32_1 = arith.constant 0 : i32
    return %arg0, %c0_i32, %c0_i32_0 : i32, i32, i32
  }
  func.func @transform_1(%arg0: i32) -> (i32, i32, i32) {
    %c0_i32 = arith.constant 0 : i32
    %c0_i32_0 = arith.constant 0 : i32
    %c0_i32_1 = arith.constant 0 : i32
    return %arg0, %c0_i32, %c0_i32_0 : i32, i32, i32
  }
  func.func @transform_2(%arg0: i32) -> (i32, i32) {
    %c0_i32 = arith.constant 0 : i32
    %c0_i32_0 = arith.constant 0 : i32
    %c0_i32_1 = arith.constant 0 : i32
    return %c0_i32, %c0_i32_0 : i32, i32
  }
  func.func @transform_3(%arg0: i32) -> (i32, i32) {
    %c0_i32 = arith.constant 0 : i32
    %c0_i32_0 = arith.constant 0 : i32
    %c0_i32_1 = arith.constant 0 : i32
    return %c0_i32, %c0_i32_0 : i32, i32
  }
  func.func @transform_4(%arg0: i32) -> (i32, i32) {
    %c0_i32 = arith.constant 0 : i32
    %c0_i32_0 = arith.constant 0 : i32
    %c0_i32_1 = arith.constant 0 : i32
    return %c0_i32, %c0_i32_0 : i32, i32
  }
  func.func @transform_5(%arg0: i32) -> (i32, i32, i32) {
    %c0_i32 = arith.constant 0 : i32
    %c0_i32_0 = arith.constant 0 : i32
    %c0_i32_1 = arith.constant 0 : i32
    return %arg0, %c0_i32, %c0_i32_0 : i32, i32, i32
  }
}

</mosaic_0001>

<llo_original>
// kernel: diff_unpool_forward.1
$region0: #{diff_unpool_forward.1}
  #allocation0 [shape = 'u32[]', space=smem, size = 0x4, offset = 0x4, fixed_abs, tag = 'smem constant byte address 0x4 - core index']
  #allocation1 [shape = 'u32[144,128]{1,0:T(1,128)}', space=vmem, size = 0x12000, scoped, tag = 'internal scratch']
  %s0 = inlined_call_operand.vmem [shape: f32[4,32,128], index: 0, kind: input, shape index: {}]
  %s1 = inlined_call_operand.vmem [shape: f32[4,32,16], index: 1, kind: input, shape index: {}]
  %s2 = inlined_call_operand.vmem [shape: f32[16,32], index: 2, kind: input, shape index: {}]
  %s3 = inlined_call_operand.vmem [shape: f32[16,1], index: 3, kind: input, shape index: {}]
  %s4 = inlined_call_operand.vmem [shape: f32[32,2], index: 4, kind: input, shape index: {}]
  %s5 = inlined_call_operand.hbm [shape: f32[4,32,128], index: 5, kind: output, shape index: {}]
  %s6 = sld [smem:[#allocation0]]
  $region53: #{diff_unpool_forward.1} parent=0
    _
  %s8 = ssub.s32 1, %s6
  %s9 = scalar_select 0, %s8, %s6
  $region1: #{diff_unpool_forward.1} parent=0
    #allocation2 [shape = 'u8[32768]{0}', space=vmem, size = 0x8000, scoped, tag = 'output window, operand 0']
    #allocation3 [shape = 's32[2]{0}', space=sflag, size = 0x8, scoped, tag = 'scoped memory for diff_unpool_forward.1']
    %10 = vsyncpa [#allocation3], 0
    %s11 = scalar_lea.sflag [#allocation3], 1
    %12 = vsyncpa %s11, 0
    loop: start=0, step=1, limit=6
    $region2: #{diff_unpool_forward.1} parent=1 // loop_pre_header
      _
    $region3: #{diff_unpool_forward.1} parent=1 // loop_header
      %s14 = sphi 0, %s18
      %p15 = scmp.ge.s32.totalorder %s14, 6
      %s24 = sphi 0, %s26
      %s27 = sphi 0, %s24
      %s28 = sphi 0, %s27
      %s44 = sphi 0, %s28
      %s50 = sphi 0, %s52
      %s53 = sphi 0, %s50
      %s54 = sphi 0, %s53
      %s70 = sphi 0, %s54
      %s74 = sphi 0, %s74
      %s76 = sphi 0, %s74
      %s77 = sphi 0, %s76
      %s91 = sphi 0, %s77
      %s95 = sphi 0, %s95
      %s97 = sphi 0, %s95
      %s98 = sphi 0, %s97
      %s112 = sphi 0, %s98
      %s116 = sphi 0, %s116
      %s118 = sphi 0, %s116
      %s119 = sphi 0, %s118
      %s133 = sphi 0, %s119
      %s139 = sphi 0, %s141
      %s142 = sphi 0, %s139
      %s143 = sphi 0, %s142
      %s159 = sphi 0, %s143
    $region4: #{diff_unpool_forward.1} parent=1 // loop_header_branch
      %17 = sbr.rel (%p15) target = $region8
    $region5: #{diff_unpool_forward.1} parent=1 // loop_body
      %s19 = ssub.s32 %s14, 1
      %s20 = ssub.s32 %s14, 2
      %s21 = sadd.s32 %s14, 1
      %s22 = ssub.s32 %s14, %s21
      %p23 = scmp.eq.s32.totalorder %s22, 0
      %s25 = sadd.s32 %s24, 1
      %s26 = scalar_select %p23, %s24, %s25
      %p29 = pneg %p23
      %p30 = scmp.eq.s32.totalorder %s14, 3
      %p31 = por %p29, %p30
      %p32 = scmp.ne.s32.totalorder %s24, %s27
      %p33 = scmp.eq.s32.totalorder %s14, 0
      %p34 = por %p32, %p33
      %p35 = scmp.ne.s32.totalorder %s24, %s27
      %p36 = scmp.eq.s32.totalorder %s19, 3
      %p37 = por %p35, %p36
      %p38 = scmp.ne.s32.totalorder %s27, %s28
      %p39 = scmp.eq.s32.totalorder %s19, 0
      %p40 = por %p38, %p39
      %p41 = scmp.ne.s32.totalorder %s27, %s28
      %p42 = scmp.eq.s32.totalorder %s20, 3
      %p43 = por %p41, %p42
      %p45 = scmp.ne.s32.totalorder %s28, %s44
      %p46 = scmp.eq.s32.totalorder %s20, 0
      %p47 = por %p45, %p46
      %s48 = ssub.s32 %s14, %s21
      %p49 = scmp.eq.s32.totalorder %s48, 0
      %s51 = sadd.s32 %s50, 1
      %s52 = scalar_select %p49, %s50, %s51
      %p55 = pneg %p49
      %p56 = scmp.eq.s32.totalorder %s14, 3
      %p57 = por %p55, %p56
      %p58 = scmp.ne.s32.totalorder %s50, %s53
      %p59 = scmp.eq.s32.totalorder %s14, 0
      %p60 = por %p58, %p59
      %p61 = scmp.ne.s32.totalorder %s50, %s53
      %p62 = scmp.eq.s32.totalorder %s19, 3
      %p63 = por %p61, %p62
      %p64 = scmp.ne.s32.totalorder %s53, %s54
      %p65 = scmp.eq.s32.totalorder %s19, 0
      %p66 = por %p64, %p65
      %p67 = scmp.ne.s32.totalorder %s53, %s54
      %p68 = scmp.eq.s32.totalorder %s20, 3
      %p69 = por %p67, %p68
      %p71 = scmp.ne.s32.totalorder %s54, %s70
      %p72 = scmp.eq.s32.totalorder %s20, 0
      %p73 = por %p71, %p72
      %s75 = sadd.s32 %s74, 1
      %p78 = scmp.eq.s32.totalorder %s14, 3
      %p79 = scmp.ne.s32.totalorder %s74, %s76
      %p80 = scmp.eq.s32.totalorder %s14, 0
      %p81 = por %p79, %p80
      %p82 = scmp.ne.s32.totalorder %s74, %s76
      %p83 = scmp.eq.s32.totalorder %s19, 3
      %p84 = por %p82, %p83
      %p85 = scmp.ne.s32.totalorder %s76, %s77
      %p86 = scmp.eq.s32.totalorder %s19, 0
      %p87 = por %p85, %p86
      %p88 = scmp.ne.s32.totalorder %s76, %s77
      %p89 = scmp.eq.s32.totalorder %s20, 3
      %p90 = por %p88, %p89
      %p92 = scmp.ne.s32.totalorder %s77, %s91
      %p93 = scmp.eq.s32.totalorder %s20, 0
      %p94 = por %p92, %p93
      %s96 = sadd.s32 %s95, 1
      %p99 = scmp.eq.s32.totalorder %s14, 3
      %p100 = scmp.ne.s32.totalorder %s95, %s97
      %p101 = scmp.eq.s32.totalorder %s14, 0
      %p102 = por %p100, %p101
      %p103 = scmp.ne.s32.totalorder %s95, %s97
      %p104 = scmp.eq.s32.totalorder %s19, 3
      %p105 = por %p103, %p104
      %p106 = scmp.ne.s32.totalorder %s97, %s98
      %p107 = scmp.eq.s32.totalorder %s19, 0
      %p108 = por %p106, %p107
      %p109 = scmp.ne.s32.totalorder %s97, %s98
      %p110 = scmp.eq.s32.totalorder %s20, 3
      %p111 = por %p109, %p110
      %p113 = scmp.ne.s32.totalorder %s98, %s112
      %p114 = scmp.eq.s32.totalorder %s20, 0
      %p115 = por %p113, %p114
      %s117 = sadd.s32 %s116, 1
      %p120 = scmp.eq.s32.totalorder %s14, 3
      %p121 = scmp.ne.s32.totalorder %s116, %s118
      %p122 = scmp.eq.s32.totalorder %s14, 0
      %p123 = por %p121, %p122
      %p124 = scmp.ne.s32.totalorder %s116, %s118
      %p125 = scmp.eq.s32.totalorder %s19, 3
      %p126 = por %p124, %p125
      %p127 = scmp.ne.s32.totalorder %s118, %s119
      %p128 = scmp.eq.s32.totalorder %s19, 0
      %p129 = por %p127, %p128
      %p130 = scmp.ne.s32.totalorder %s118, %s119
      %p131 = scmp.eq.s32.totalorder %s20, 3
      %p132 = por %p130, %p131
      %p134 = scmp.ne.s32.totalorder %s119, %s133
      %p135 = scmp.eq.s32.totalorder %s20, 0
      %p136 = por %p134, %p135
      %s137 = ssub.s32 %s14, %s21
      %p138 = scmp.eq.s32.totalorder %s137, 0
      %s140 = sadd.s32 %s139, 1
      %s141 = scalar_select %p138, %s139, %s140
      %p144 = pneg %p138
      %p145 = scmp.eq.s32.totalorder %s14, 3
      %p146 = por %p144, %p145
      %p147 = scmp.ne.s32.totalorder %s139, %s142
      %p148 = scmp.eq.s32.totalorder %s14, 0
      %p149 = por %p147, %p148
      %p150 = scmp.ne.s32.totalorder %s139, %s142
      %p151 = scmp.eq.s32.totalorder %s19, 3
      %p152 = por %p150, %p151
      %p153 = scmp.ne.s32.totalorder %s142, %s143
      %p154 = scmp.eq.s32.totalorder %s19, 0
      %p155 = por %p153, %p154
      %p156 = scmp.ne.s32.totalorder %s142, %s143
      %p157 = scmp.eq.s32.totalorder %s20, 3
      %p158 = por %p156, %p157
      %p160 = scmp.ne.s32.totalorder %s143, %s159
      %p161 = scmp.eq.s32.totalorder %s20, 0
      %p162 = por %p160, %p161
      %p163 = scmp.le.s32.totalorder 1, %s14
      %p164 = scmp.lt.s32.totalorder %s14, 5
      %p165 = pnand %p163, %p164
      %p166 = pneg %p165
      // Predicated region
      $region9: #{diff_unpool_forward.1} parent=5 // pred_check
        _
      $region10: #{diff_unpool_forward.1} parent=5 // pred_check_branch
        %168 = sbr.rel (%p165) target = $region12
      $region11: #{diff_unpool_forward.1} parent=5 // pred_region
        %s169 = ssub.s32 %s14, 1
        // Predicated region
        $region13: #{diff_unpool_forward.1} parent=11 // pred_check
          %p170 = pneg %p87
        $region14: #{diff_unpool_forward.1} parent=11 // pred_check_branch
          %172 = sbr.rel (%p170) target = $region16
        $region15: #{diff_unpool_forward.1} parent=11 // pred_region
          _
        $region16: #{diff_unpool_forward.1} parent=11 // pred_fallthru
          _
        // Predicated region
        $region17: #{diff_unpool_forward.1} parent=11 // pred_check
          %p173 = pneg %p108
        $region18: #{diff_unpool_forward.1} parent=11 // pred_check_branch
          %175 = sbr.rel (%p173) target = $region20
        $region19: #{diff_unpool_forward.1} parent=11 // pred_region
          _
        $region20: #{diff_unpool_forward.1} parent=11 // pred_fallthru
          _
        // Predicated region
        $region21: #{diff_unpool_forward.1} parent=11 // pred_check
          %p176 = pneg %p129
        $region22: #{diff_unpool_forward.1} parent=11 // pred_check_branch
          %178 = sbr.rel (%p176) target = $region24
        $region23: #{diff_unpool_forward.1} parent=11 // pred_region
          _
        $region24: #{diff_unpool_forward.1} parent=11 // pred_fallthru
          _
      $region12: #{diff_unpool_forward.1} parent=5 // pred_fallthru
        _
      %p179 = scmp.lt.s32.totalorder %s14, 4
      // Predicated region
      $region25: #{diff_unpool_forward.1} parent=5 // pred_check
        %p180 = pneg %p179
      $region26: #{diff_unpool_forward.1} parent=5 // pred_check_branch
        %182 = sbr.rel (%p180) target = $region28
      $region27: #{diff_unpool_forward.1} parent=5 // pred_region
        // Predicated region
        $region29: #{diff_unpool_forward.1} parent=27 // pred_check
          %p183 = pneg %p34
        $region30: #{diff_unpool_forward.1} parent=27 // pred_check_branch
          %185 = sbr.rel (%p183) target = $region32
        $region31: #{diff_unpool_forward.1} parent=27 // pred_region
          %p186 = scmp.lt.s32.totalorder %s14, 3
          %s187 = scalar_select %p186, %s14, 3
          %s188 = smul.addr %s187, 4
          %s189 = smul.addr %s188, 8
          %s190 = scalar_lea.vmem %s0, %s189
        $region32: #{diff_unpool_forward.1} parent=27 // pred_fallthru
          _
        // Predicated region
        $region33: #{diff_unpool_forward.1} parent=27 // pred_check
          %p191 = pneg %p60
        $region34: #{diff_unpool_forward.1} parent=27 // pred_check_branch
          %193 = sbr.rel (%p191) target = $region36
        $region35: #{diff_unpool_forward.1} parent=27 // pred_region
          %p194 = scmp.lt.s32.totalorder %s14, 3
          %s195 = scalar_select %p194, %s14, 3
          %s196 = smul.addr %s195, 4
          %s197 = smul.addr %s196, 8
          %s198 = scalar_lea.vmem %s1, %s197
        $region36: #{diff_unpool_forward.1} parent=27 // pred_fallthru
          _
      $region28: #{diff_unpool_forward.1} parent=5 // pred_fallthru
        _
      %p199 = scmp.le.s32.totalorder 1, %s14
      %p200 = scmp.lt.s32.totalorder %s14, 5
      %p201 = pnand %p199, %p200
      %p202 = pneg %p201
      // Predicated region
      $region37: #{diff_unpool_forward.1} parent=5 // pred_check
        _
      $region38: #{diff_unpool_forward.1} parent=5 // pred_check_branch
        %204 = sbr.rel (%p201) target = $region40
      $region39: #{diff_unpool_forward.1} parent=5 // pred_region
        %s205 = ssub.s32 %s14, 1
        %p206 = scmp.lt.s32.totalorder %s19, 3
        %s207 = scalar_select %p206, %s19, 3
        %s208 = smul.addr %s207, 4
        %s209 = smul.addr %s208, 8
        %s210 = scalar_lea.vmem %s0, %s209
        %p211 = pneg %p40
        %p212 = pneg %p37
        %p213 = scmp.lt.s32.totalorder %s19, 3
        %s214 = scalar_select %p213, %s19, 3
        %s215 = smul.addr %s214, 4
        %s216 = smul.addr %s215, 8
        %s217 = scalar_lea.vmem %s1, %s216
        %p218 = pneg %p66
        %p219 = pneg %p63
        %p220 = pneg %p87
        %p221 = pneg %p84
        %p222 = pneg %p108
        %p223 = pneg %p105
        %p224 = pneg %p129
        %p225 = pneg %p126
        %p226 = pneg %p155
        %p227 = pneg %p152
        %s228 = sand.u32 %s142, 1
        %s229 = scalar_lea.sflag [#allocation3], %s228
        %s230 = sand.u32 %s142, 1
        %s231 = smul.addr %s230, 32
        %s232 = scalar_lea.vmem [#allocation2], %s231
        %p233 = scmp.lt.s32.totalorder %s19, 3
        %s234 = scalar_select %p233, %s19, 3
        %s235 = smul.addr %s234, 4
        %s236 = smul.addr %s235, 8
        %s237 = scalar_lea.vmem %s0, %s236
        %p238 = scmp.lt.s32.totalorder %s19, 3
        %s239 = scalar_select %p238, %s19, 3
        %s240 = smul.addr %s239, 4
        %s241 = smul.addr %s240, 8
        %s242 = scalar_lea.vmem %s1, %s241
        %v243 = vld [vmem:[%s237] sm:$0xff]
        %v244 = vld [vmem:[%s237 + $0x8] sm:$0xff]
        %v245 = vld [vmem:[%s237 + $0x10] sm:$0xff]
        %v246 = vld [vmem:[%s237 + $0x18] sm:$0xff]
        %247 = vadd.xlane.f32.xlu0 %v243
        %v248 = vpop.xlane.xlu0 %247
        %249 = vadd.xlane.f32.xlu0 %v244
        %v250 = vpop.xlane.xlu0 %249
        %251 = vadd.xlane.f32.xlu0 %v245
        %v252 = vpop.xlane.xlu0 %251
        %253 = vadd.xlane.f32.xlu0 %v246
        %v254 = vpop.xlane.xlu0 %253
        %v255 = vmul.f32 %v248, 0.0078125
        %v256 = vmul.f32 %v250, 0.0078125
        %v257 = vmul.f32 %v252, 0.0078125
        %v258 = vmul.f32 %v254, 0.0078125
        %v259 = vmul.f32 %v243, %v243
        %v260 = vmul.f32 %v244, %v244
        %v261 = vmul.f32 %v245, %v245
        %v262 = vmul.f32 %v246, %v246
        %263 = vadd.xlane.f32.xlu0 %v259
        %v264 = vpop.xlane.xlu0 %263
        %265 = vadd.xlane.f32.xlu0 %v260
        %v266 = vpop.xlane.xlu0 %265
        %267 = vadd.xlane.f32.xlu0 %v261
        %v268 = vpop.xlane.xlu0 %267
        %269 = vadd.xlane.f32.xlu0 %v262
        %v270 = vpop.xlane.xlu0 %269
        %v271 = vmul.f32 %v264, 0.0078125
        %v272 = vmul.f32 %v266, 0.0078125
        %v273 = vmul.f32 %v268, 0.0078125
        %v274 = vmul.f32 %v270, 0.0078125
        %v275 = vmul.f32 %v255, %v255
        %v276 = vmul.f32 %v256, %v256
        %v277 = vmul.f32 %v257, %v257
        %v278 = vmul.f32 %v258, %v258
        %v279 = vsub.f32 %v271, %v275
        %v280 = vsub.f32 %v272, %v276
        %v281 = vsub.f32 %v273, %v277
        %v282 = vsub.f32 %v274, %v278
        %v283 = vld [vmem:[%s4] sm:$0xff]
        %v284 = vld [vmem:[%s4 + $0x8] sm:$0xff]
        %v285 = vld [vmem:[%s4 + $0x10] sm:$0xff]
        %v286 = vld [vmem:[%s4 + $0x18] sm:$0xff]
        %v287 = vadd.f32 %v279, 0.001
        %v288 = vadd.f32 %v280, 0.001
        %v289 = vadd.f32 %v281, 0.001
        %v290 = vadd.f32 %v282, 0.001
        %v291 = vrsqrt.pop %v287
        %v292 = vrsqrt.pop %v288
        %v293 = vrsqrt.pop %v289
        %v294 = vrsqrt.pop %v290
        %v295 = vmul.f32 %v291, %v283
        %v296 = vmul.f32 %v292, %v284
        %v297 = vmul.f32 %v293, %v285
        %v298 = vmul.f32 %v294, %v286
        %v299 = vsub.f32 %v243, %v255
        %v300 = vsub.f32 %v244, %v256
        %v301 = vsub.f32 %v245, %v257
        %v302 = vsub.f32 %v246, %v258
        %304 = vset.pattern.permute.xlu0 0
        %305 = vperm.xlu0 %304, %v295
        %v306 = vpop.permute.xlu0 %305
        %309 = vset.pattern.permute.xlu0 0
        %310 = vperm.xlu0 %309, %v296
        %v311 = vpop.permute.xlu0 %310
        %314 = vset.pattern.permute.xlu0 0
        %315 = vperm.xlu0 %314, %v297
        %v316 = vpop.permute.xlu0 %315
        %319 = vset.pattern.permute.xlu0 0
        %320 = vperm.xlu0 %319, %v298
        %v321 = vpop.permute.xlu0 %320
        %v323 = vmul.f32 %v299, %v306
        %v324 = vmul.f32 %v300, %v311
        %v325 = vmul.f32 %v301, %v316
        %v326 = vmul.f32 %v302, %v321
        %328 = vset.pattern.permute.xlu0 1
        %329 = vperm.xlu0 %328, %v283
        %v330 = vpop.permute.xlu0 %329
        %333 = vset.pattern.permute.xlu0 1
        %334 = vperm.xlu0 %333, %v284
        %v335 = vpop.permute.xlu0 %334
        %338 = vset.pattern.permute.xlu0 1
        %339 = vperm.xlu0 %338, %v285
        %v340 = vpop.permute.xlu0 %339
        %343 = vset.pattern.permute.xlu0 1
        %344 = vperm.xlu0 %343, %v286
        %v345 = vpop.permute.xlu0 %344
        %v347 = vadd.f32 %v323, %v330
        %v348 = vadd.f32 %v324, %v335
        %v349 = vadd.f32 %v325, %v340
        %v350 = vadd.f32 %v326, %v345
        %v351 = vmax.f32 %v347, 0.0
        %v352 = vmax.f32 %v348, 0.0
        %v353 = vmax.f32 %v349, 0.0
        %v354 = vmax.f32 %v350, 0.0
        %v355 = vld [vmem:[%s2] sm:$0xff]
        %v356 = vld [vmem:[%s2 + $0x8] sm:$0xff]
        %v357 = vld [vmem:[%s3] sm:$0xff]
        %v358 = vld [vmem:[%s3 + $0x8] sm:$0xff]
        %360 = vset.pattern.permute.xlu0 0
        %361 = vperm.xlu0 %360, %v357
        %v362 = vpop.permute.xlu0 %361
        %365 = vset.pattern.permute.xlu0 0
        %366 = vperm.xlu0 %365, %v358
        %v367 = vpop.permute.xlu0 %366
        %vm369 = vcmask 261120
        %v371 = vsel %vm369, %v355, 0
        %v374 = vsel %vm369, %v356, 0
        %376 = vmatprep.subr.mxu0 0.0
        %377 = vmatpush1.msra.mxu0 0.0
        %378 = vmatprep.subr.mxu0 0.0
        %379 = vmatpush1.msra.mxu0 0.0
        %380 = vmatprep.subr.mxu0 0.0
        %381 = vmatpush1.msra.mxu0 0.0
        %382 = vmatprep.subr.mxu0 0.0
        %383 = vmatpush1.msra.mxu0 0.0
        %384 = vmatprep.subr.mxu0 0.0
        %385 = vmatpush1.msra.mxu0 0.0
        %386 = vmatprep.subr.mxu0 0.0
        %387 = vmatpush1.msra.mxu0 0.0
        %388 = vmatprep.subr.mxu0 0.0
        %389 = vmatpush1.msra.mxu0 0.0
        %390 = vmatprep.subr.mxu0 0.0
        %391 = vmatpush1.msra.mxu0 0.0
        %392 = vmatprep.subr.mxu0 0.0
        %393 = vmatpush1.msra.mxu0 0.0
        %394 = vmatprep.subr.mxu0 0.0
        %395 = vmatpush1.msra.mxu0 0.0
        %396 = vmatprep.subr.mxu0 0.0
        %397 = vmatpush1.msra.mxu0 0.0
        %398 = vmatprep.subr.mxu0 0.0
        %399 = vmatpush1.msra.mxu0 0.0
        %400 = vmatprep.subr.mxu0 0.0
        %401 = vmatpush1.msra.mxu0 %v354
        %402 = vmatprep.subr.mxu0 0.0
        %403 = vmatpush1.msra.mxu0 %v353
        %404 = vmatprep.subr.mxu0 0.0
        %405 = vmatpush1.msra.mxu0 %v352
        %406 = vmatprep.subr.mxu0 0.0
        %407 = vmatpush1.msra.mxu0 %v351
        %408 = vmatprep.subr.mxu0 0.0
        %409 = vmatpush2.msra.mxu0 0.0
        %410 = vmatprep.subr.mxu0 0.0
        %411 = vmatpush2.msra.mxu0 0.0
        %412 = vmatprep.subr.mxu0 0.0
        %413 = vmatpush2.msra.mxu0 0.0
        %414 = vmatprep.subr.mxu0 0.0
        %415 = vmatpush2.msra.mxu0 0.0
        %416 = vmatprep.subr.mxu0 0.0
        %417 = vmatpush2.msra.mxu0 0.0
        %418 = vmatprep.subr.mxu0 0.0
        %419 = vmatpush2.msra.mxu0 0.0
        %420 = vmatprep.subr.mxu0 0.0
        %421 = vmatpush2.msra.mxu0 0.0
        %422 = vmatprep.subr.mxu0 0.0
        %423 = vmatpush2.msra.mxu0 0.0
        %424 = vmatprep.subr.mxu0 0.0
        %425 = vmatpush2.msra.mxu0 0.0
        %426 = vmatprep.subr.mxu0 0.0
        %427 = vmatpush2.msra.mxu0 0.0
        %428 = vmatprep.subr.mxu0 0.0
        %429 = vmatpush2.msra.mxu0 0.0
        %430 = vmatprep.subr.mxu0 0.0
        %431 = vmatpush2.msra.mxu0 0.0
        %432 = vmatprep.subr.mxu0 0.0
        %433 = vmatpush2.msra.mxu0 0.0
        %434 = vmatprep.subr.mxu0 0.0
        %435 = vmatpush2.msra.mxu0 0.0
        %436 = vmatprep.subr.mxu0 0.0
        %437 = vmatpush2.msra.mxu0 0.0
        %438 = vmatprep.subr.mxu0 0.0
        %439 = vmatpush2.msra.mxu0 0.0
        %440 = vmatprep.mubr.f32.mxu0 0.0
        %441 = vmatmul.mubr.f32.gmra.mxu0 %v371
        %v442 = vpop.f32.mrf.mxu0
        %v443 = vadd.f32 %v362, %v442
        %v444 = vpop.f32.mrf.mxu0
        %445 = vmatprep.mubr.f32.mxu0 0.0
        %446 = vmatmul.mubr.f32.gmra.mxu0 %v374
        %v447 = vpop.f32.mrf.mxu0
        %v448 = vadd.f32 %v367, %v447
        %v449 = vpop.f32.mrf.mxu0
        %450 = vdwg.mxu0
        %v451 = vmax.f32 %v443, %v448
        %v452 = vrot.slane %v451, 4
        %v453 = vmax.f32 %v451, %v452
        %v454 = vrot.slane %v453, 2
        %v455 = vmax.f32 %v453, %v454
        %v456 = vrot.slane %v455, 1
        %v457 = vmax.f32 %v455, %v456
        %v458 = vsub.f32 %v443, %v457
        %v459 = vsub.f32 %v448, %v457
        %v460 = vmul.f32 %v458, 1.442695
        %v461 = vpow.pop %v460
        %v462 = vmul.f32 %v459, 1.442695
        %v463 = vpow.pop %v462
        %v464 = vadd.f32 %v461, %v463
        %v465 = vrot.slane %v464, 4
        %v466 = vadd.f32 %v464, %v465
        %v467 = vrot.slane %v466, 2
        %v468 = vadd.f32 %v466, %v467
        %v469 = vrot.slane %v468, 1
        %v470 = vadd.f32 %v468, %v469
        %v471 = vrcp.pop %v470
        %v472 = vmul.f32 %v461, %v471
        %v473 = vmul.f32 %v463, %v471
        %v474 = vld [vmem:[%s242] sm:$0xff]
        %v475 = vld [vmem:[%s242 + $0x8] sm:$0xff]
        %v476 = vld [vmem:[%s242 + $0x10] sm:$0xff]
        %v477 = vld [vmem:[%s242 + $0x18] sm:$0xff]
        %vm478 = vcmask 130048
        %v480 = vsel %vm478, %v474, 0
        %v483 = vsel %vm478, %v475, 0
        %v486 = vsel %vm478, %v476, 0
        %v489 = vsel %vm478, %v477, 0
        %491 = vmatprep.subr.mxu0 0.0
        %492 = vmatpush1.msra.mxu0 0.0
        %493 = vmatprep.subr.mxu0 0.0
        %494 = vmatpush1.msra.mxu0 0.0
        %495 = vmatprep.subr.mxu0 0.0
        %496 = vmatpush1.msra.mxu0 0.0
        %497 = vmatprep.subr.mxu0 0.0
        %498 = vmatpush1.msra.mxu0 0.0
        %499 = vmatprep.subr.mxu0 0.0
        %500 = vmatpush1.msra.mxu0 0.0
        %501 = vmatprep.subr.mxu0 0.0
        %502 = vmatpush1.msra.mxu0 0.0
        %503 = vmatprep.subr.mxu0 0.0
        %504 = vmatpush1.msra.mxu0 0.0
        %505 = vmatprep.subr.mxu0 0.0
        %506 = vmatpush1.msra.mxu0 0.0
        %507 = vmatprep.subr.mxu0 0.0
        %508 = vmatpush1.msra.mxu0 0.0
        %509 = vmatprep.subr.mxu0 0.0
        %510 = vmatpush1.msra.mxu0 0.0
        %511 = vmatprep.subr.mxu0 0.0
        %512 = vmatpush1.msra.mxu0 0.0
        %513 = vmatprep.subr.mxu0 0.0
        %514 = vmatpush1.msra.mxu0 0.0
        %515 = vmatprep.subr.mxu0 0.0
        %516 = vmatpush1.msra.mxu0 0.0
        %517 = vmatprep.subr.mxu0 0.0
        %518 = vmatpush1.msra.mxu0 0.0
        %519 = vmatprep.subr.mxu0 0.0
        %520 = vmatpush1.msra.mxu0 %v473
        %521 = vmatprep.subr.mxu0 0.0
        %522 = vmatpush1.msra.mxu0 %v472
        %523 = vmatprep.subr.mxu0 0.0
        %524 = vmatpush2.msra.mxu0 0.0
        %525 = vmatprep.subr.mxu0 0.0
        %526 = vmatpush2.msra.mxu0 0.0
        %527 = vmatprep.subr.mxu0 0.0
        %528 = vmatpush2.msra.mxu0 0.0
        %529 = vmatprep.subr.mxu0 0.0
        %530 = vmatpush2.msra.mxu0 0.0
        %531 = vmatprep.subr.mxu0 0.0
        %532 = vmatpush2.msra.mxu0 0.0
        %533 = vmatprep.subr.mxu0 0.0
        %534 = vmatpush2.msra.mxu0 0.0
        %535 = vmatprep.subr.mxu0 0.0
        %536 = vmatpush2.msra.mxu0 0.0
        %537 = vmatprep.subr.mxu0 0.0
        %538 = vmatpush2.msra.mxu0 0.0
        %539 = vmatprep.subr.mxu0 0.0
        %540 = vmatpush2.msra.mxu0 0.0
        %541 = vmatprep.subr.mxu0 0.0
        %542 = vmatpush2.msra.mxu0 0.0
        %543 = vmatprep.subr.mxu0 0.0
        %544 = vmatpush2.msra.mxu0 0.0
        %545 = vmatprep.subr.mxu0 0.0
        %546 = vmatpush2.msra.mxu0 0.0
        %547 = vmatprep.subr.mxu0 0.0
        %548 = vmatpush2.msra.mxu0 0.0
        %549 = vmatprep.subr.mxu0 0.0
        %550 = vmatpush2.msra.mxu0 0.0
        %551 = vmatprep.subr.mxu0 0.0
        %552 = vmatpush2.msra.mxu0 0.0
        %553 = vmatprep.subr.mxu0 0.0
        %554 = vmatpush2.msra.mxu0 0.0
        %555 = vmatprep.mubr.f32.mxu0 0.0
        %556 = vmatmul.mubr.f32.gmra.mxu0 %v480
        %v557 = vpop.f32.mrf.mxu0
        %v558 = vadd.f32 0.0, %v557
        %v559 = vpop.f32.mrf.mxu0
        %560 = vmatprep.mubr.f32.mxu0 0.0
        %561 = vmatmul.mubr.f32.gmra.mxu0 %v483
        %v562 = vpop.f32.mrf.mxu0
        %v563 = vadd.f32 0.0, %v562
        %v564 = vpop.f32.mrf.mxu0
        %565 = vmatprep.mubr.f32.mxu0 0.0
        %566 = vmatmul.mubr.f32.gmra.mxu0 %v486
        %v567 = vpop.f32.mrf.mxu0
        %v568 = vadd.f32 0.0, %v567
        %v569 = vpop.f32.mrf.mxu0
        %570 = vmatprep.mubr.f32.mxu0 0.0
        %571 = vmatmul.mubr.f32.gmra.mxu0 %v489
        %v572 = vpop.f32.mrf.mxu0
        %v573 = vadd.f32 0.0, %v572
        %v574 = vpop.f32.mrf.mxu0
        %575 = vdwg.mxu0
        %576 = vst [vmem:[%s232] sm:$0xff] %v558
        %577 = vst [vmem:[%s232 + $0x8] sm:$0xff] %v563
        %578 = vst [vmem:[%s232 + $0x10] sm:$0xff] %v568
        %579 = vst [vmem:[%s232 + $0x18] sm:$0xff] %v573
        %s580 = sand.u32 %s142, 1
        %s581 = scalar_lea.sflag [#allocation3], %s580
        %s582 = sand.u32 %s142, 1
        %s583 = smul.addr %s582, 32
        %s584 = scalar_lea.vmem [#allocation2], %s583
        // Predicated region
        $region41: #{diff_unpool_forward.1} parent=39 // pred_check
          %p585 = pneg %p152
        $region42: #{diff_unpool_forward.1} parent=39 // pred_check_branch
          %587 = sbr.rel (%p585) target = $region44
        $region43: #{diff_unpool_forward.1} parent=39 // pred_region
          %s589 = ssub.s32 512, 512
          %590 = vsyncadd %s581, %s589
          %s591 = smul.addr %s19, 4
          %s592 = smul.addr %s591, 128
          %s593 = scalar_lea.hbm %s5, %s592
          %s594 = sshll.u32 %s584, 4
          %s595 = int_to_ptr.vmem [resolvable:$true] %s594
          %600 = dma.vmem_to_hbm [thread:$0]  %s595, 512, %s593, %s581, 128, 128, 8
        $region44: #{diff_unpool_forward.1} parent=39 // pred_fallthru
          _
      $region40: #{diff_unpool_forward.1} parent=5 // pred_fallthru
        _
      %p601 = scmp.le.s32.totalorder 2, %s14
      // Predicated region
      $region45: #{diff_unpool_forward.1} parent=5 // pred_check
        %p602 = pneg %p601
      $region46: #{diff_unpool_forward.1} parent=5 // pred_check_branch
        %604 = sbr.rel (%p602) target = $region48
      $region47: #{diff_unpool_forward.1} parent=5 // pred_region
        %s605 = ssub.s32 %s14, 2
        // Predicated region
        $region49: #{diff_unpool_forward.1} parent=47 // pred_check
          %p606 = pneg %p158
        $region50: #{diff_unpool_forward.1} parent=47 // pred_check_branch
          %608 = sbr.rel (%p606) target = $region52
        $region51: #{diff_unpool_forward.1} parent=47 // pred_region
          %s609 = sand.u32 %s143, 1
          %s610 = scalar_lea.sflag [#allocation3], %s609
          %s611 = sand.u32 %s143, 1
          %s612 = smul.addr %s611, 32
          %s613 = scalar_lea.vmem [#allocation2], %s612
          %614 = dma.done %s610, 512
        $region52: #{diff_unpool_forward.1} parent=47 // pred_fallthru
          _
      $region48: #{diff_unpool_forward.1} parent=5 // pred_fallthru
        _
    $region6: #{diff_unpool_forward.1} parent=1 // loop_footer
      %s18 = sadd.s32 1, %s14
    $region7: #{diff_unpool_forward.1} parent=1 // loop_footer_branch
      %13 = sbr.rel target = $region3
    $region8: #{diff_unpool_forward.1} parent=1 // loop_exit
      _
    %615 = vsyncpa [#allocation3], 1
    %s616 = scalar_lea.sflag [#allocation3], 1
    %617 = vsyncpa %s616, 1

</llo_original>
